<compile_context>
chip_gen: v7x
topology: tpu7x:2x2x1
jax: 0.10.0
libtpu: 0.0.40
codegen_flags: <defaults>
</compile_context>

<pallas_src>
import functools

import numpy as np
import jax
import jax.numpy as jnp
from jax.experimental import pallas as pl
from jax.experimental.pallas import tpu as pltpu


# -----------------------------------------------------------------------------
# pltpu.roll direction probe (cached per device kind).
# We need rolled[s] == v[(s + delta) % S]. With numpy convention
# (np.roll(x, a)[i] == x[(i - a) % n]) the shift is (-delta) % S; if the lowering
# uses the opposite convention it is (+delta) % S.
# -----------------------------------------------------------------------------
@functools.lru_cache(maxsize=None)
def _roll_shift_sign(device_kind: str) -> int:
    del device_kind  # used only as the cache key

    def probe(x_ref, o_ref):
        o_ref[...] = pltpu.roll(x_ref[...], 3, axis=1)

    x = jnp.arange(8 * 128, dtype=jnp.float32).reshape(8, 128)
    out = pl.pallas_call(probe, out_shape=jax.ShapeDtypeStruct((8, 128), jnp.float32))(x)
    if bool(jnp.array_equal(out, jnp.roll(x, 3, axis=1))):
        return -1
    if bool(jnp.array_equal(out, jnp.roll(x, -3, axis=1))):
        return 1
    raise RuntimeError("could not determine pltpu.roll shift convention")


def _make_taps(H, W, K):
    """Per-tap flat-lane offsets and boundary masks for an (..., H*W) layout."""
    P = K // 2
    S = H * W
    h = np.arange(S) // W
    w = np.arange(S) % W
    deltas = []
    masks = np.zeros((K * K, S), np.float32)
    k = 0
    for dy in range(K):
        for dx in range(K):
            oy, ox = dy - P, dx - P
            deltas.append(oy * W + ox)
            masks[k] = (h + oy >= 0) & (h + oy < H) & (w + ox >= 0) & (w + ox < W)
            k += 1
    return deltas, jnp.asarray(masks)


def _default_images_per_step(n):
    """Fattest per-step batch that still leaves >= 2 grid steps (both v7x TCs busy)."""
    if n <= 2:
        return 1
    best = 1
    for b in range(1, n // 2 + 1):
        if n % b == 0:
            best = b
    return best


# -----------------------------------------------------------------------------
# Fused BasicBlock kernel (B images per grid step, flattened to (B*C, S) blocks).
# -----------------------------------------------------------------------------
def _basicblock_kernel(x_ref, wm0_ref, pw0_ref, sc0_ref, sh0_ref,
                       wms_ref, pws_ref, scs_ref, shs_ref, out_ref,
                       *, num_taps, shift_amts, num_res_block, batch_block,
                       c_in, c_out, matmul_precision):
    B = batch_block

    def dwsc_stage(v, c, get_wm, pw, scale, shift, relu):
        # v: (B*c, S) activations.
        # Depthwise taps: lane roll (XLU slot) * host-prefolded (dw x boundary-mask)
        # -> a single VALU multiply per tap.
        acc = None
        for k in range(num_taps):
            amt = shift_amts[k]
            tap = pltpu.roll(v, amt, axis=1) if amt else v
            term = tap * get_wm(k)
            acc = term if acc is None else acc + term
        # Pointwise 1x1 conv per image on the MXU, f32 accumulation, HIGHEST precision
        # (the MXU is otherwise idle, so the extra f32 passes are free).
        ys = []
        for b in range(B):
            y = jnp.dot(pw, acc[b * c:(b + 1) * c, :],
                        preferred_element_type=jnp.float32,
                        precision=matmul_precision)
            # Pointwise bias + folded eval-mode BatchNorm(s) as a per-channel affine.
            y = y * scale + shift
            y = jnp.maximum(y, 0.0) if relu else y
            ys.append(y.astype(v.dtype))
        return ys[0] if B == 1 else jnp.concatenate(ys, axis=0)

    xv = x_ref[0]                                          # (B*C_in, S)

    # Head: DWSC(Cin -> Cout) + BN + ReLU.  Kept live in vregs (it's only ~2 vregs);
    # out_ref is written exactly once at the end.
    head = dwsc_stage(xv, c_in, lambda k: wm0_ref[k],
                      pw0_ref[...], sc0_ref[...], sh0_ref[...], relu=True)

    v = head
    t = 0
    for _ in range(num_res_block):
        rb_in = v
        v = dwsc_stage(v, c_out, lambda k, t=t: wms_ref[t, k],
                       pws_ref[t], scs_ref[t], shs_ref[t], relu=True)
        t += 1
        v = dwsc_stage(v, c_out, lambda k, t=t: wms_ref[t, k],
                       pws_ref[t], scs_ref[t], shs_ref[t], relu=False)
        t += 1
        v = v + rb_in                                      # ResBlock residual

    # Tail conv: DWSC + two folded BNs, no activation.
    v = dwsc_stage(v, c_out, lambda k, t=t: wms_ref[t, k],
                   pws_ref[t], scs_ref[t], shs_ref[t], relu=False)

    # BasicBlock skip: out = tail + head.  Single store.
    out_ref[0] = (v + head).astype(out_ref.dtype)


def basicblock_pallas(x_nchw, params, *, kernel_size, num_res_block,
                      images_per_step=None, compute_dtype=jnp.float32):
    dw0, pw0, sc0, sh0, dws, pws, scs, shs = params       # raw (unfolded-mask) params
    N, C_in, H, W = x_nchw.shape
    C_out = pw0.shape[0]
    K = kernel_size
    K2 = K * K
    S = H * W
    T = 2 * num_res_block + 1

    B = images_per_step if images_per_step is not None else _default_images_per_step(N)
    assert N % B == 0, "batch must be divisible by images_per_step"
    G = N // B

    deltas, masks = _make_taps(H, W, K)                    # masks: (K2, S)
    sign = _roll_shift_sign(jax.devices()[0].device_kind)
    shift_amts = tuple((sign * d) % S for d in deltas)

    f32 = np.dtype(compute_dtype) == np.dtype(np.float32)
    matmul_precision = jax.lax.Precision.HIGHEST if f32 else jax.lax.Precision.DEFAULT

    # Host-side prefold: wm[k, c, s] = dw[k, c] * boundary_mask[k, s], tiled across the
    # B images packed into one grid step (sublane order is image-major, channel-minor).
    wm0 = dw0[:, :, None] * masks[:, None, :]              # (K2, C_in, S)
    wm0 = jnp.tile(wm0, (1, B, 1)).astype(compute_dtype)   # (K2, B*C_in, S)
    wms = dws[:, :, :, None] * masks[None, :, None, :]     # (T, K2, C_out, S)
    wms = jnp.tile(wms, (1, 1, B, 1)).astype(compute_dtype)

    pw0c = pw0.astype(compute_dtype)
    pwsc = pws.astype(compute_dtype)
    sc0c, sh0c = sc0[:, None].astype(jnp.float32), sh0[:, None].astype(jnp.float32)
    scsc, shsc = scs[..., None].astype(jnp.float32), shs[..., None].astype(jnp.float32)

    # NCHW row-major: (N, C, H*W) == (G, B*C, S); these reshapes are free (no transpose).
    x = x_nchw.reshape(G, B * C_in, S).astype(compute_dtype)

    kernel = functools.partial(
        _basicblock_kernel,
        num_taps=K2,
        shift_amts=shift_amts,
        num_res_block=num_res_block,
        batch_block=B,
        c_in=C_in,
        c_out=C_out,
        matmul_precision=matmul_precision,
    )

    flops_head = 2 * K2 * C_in * S + 2 * C_in * C_out * S
    flops_body = T * (2 * K2 * C_out * S + 2 * C_out * C_out * S)
    flops = N * (flops_head + flops_body)
    operands = (x, wm0, pw0c, sc0c, sh0c, wms, pwsc, scsc, shsc)
    bytes_accessed = sum(int(a.size) * a.dtype.itemsize for a in operands) + 4 * N * C_out * S

    out = pl.pallas_call(
        kernel,
        out_shape=jax.ShapeDtypeStruct((G, B * C_out, S), jnp.float32),
        grid=(G,),
        in_specs=[
            pl.BlockSpec((1, B * C_in, S), lambda g: (g, 0, 0)),        # x, per-group tile
            pl.BlockSpec((K2, B * C_in, S), lambda g: (0, 0, 0)),       # head dw (x) mask
            pl.BlockSpec((C_out, C_in), lambda g: (0, 0)),              # head pointwise
            pl.BlockSpec((C_out, 1), lambda g: (0, 0)),                 # head scale
            pl.BlockSpec((C_out, 1), lambda g: (0, 0)),                 # head shift
            pl.BlockSpec((T, K2, B * C_out, S), lambda g: (0, 0, 0, 0)),  # body dw (x) mask
            pl.BlockSpec((T, C_out, C_out), lambda g: (0, 0, 0)),         # body pointwise
            pl.BlockSpec((T, C_out, 1), lambda g: (0, 0, 0)),             # body scale
            pl.BlockSpec((T, C_out, 1), lambda g: (0, 0, 0)),             # body shift
        ],
        out_specs=pl.BlockSpec((1, B * C_out, S), lambda g: (g, 0, 0)),
        compiler_params=pltpu.CompilerParams(
            dimension_semantics=("parallel",),     # megacore-shard groups on v7x; neutral elsewhere
            vmem_limit_bytes=32 * 1024 * 1024,
        ),
        cost_estimate=pl.CostEstimate(
            flops=int(flops), transcendentals=0, bytes_accessed=int(bytes_accessed)),
    )(*operands)

    return out.reshape(N, C_out, H, W)


# -----------------------------------------------------------------------------
# Parameter construction (eval-mode BN folded into per-channel scale/shift).
# -----------------------------------------------------------------------------
def _fold_bn1(pw_bias, g1, b1, m1, v1, eps=1e-5):
    a1 = g1 / jnp.sqrt(v1 + eps)
    return a1, (pw_bias - m1) * a1 + b1


def _fold_bn2(pw_bias, g1, b1, m1, v1, g2, b2, m2, v2, eps=1e-5):
    a1 = g1 / jnp.sqrt(v1 + eps)
    a2 = g2 / jnp.sqrt(v2 + eps)
    scale = a1 * a2
    shift = ((pw_bias - m1) * a1 + b1 - m2) * a2 + b2
    return scale, shift


def _rand_bn(key, c):
    k1, k2, k3, k4 = jax.random.split(key, 4)
    gamma = 1.0 + 0.1 * jax.random.normal(k1, (c,), jnp.float32)
    beta = 0.1 * jax.random.normal(k2, (c,), jnp.float32)
    mean = 0.1 * jax.random.normal(k3, (c,), jnp.float32)
    var = 1.0 + 0.5 * jax.random.uniform(k4, (c,), jnp.float32)
    return gamma, beta, mean, var


def make_params(key, c_in, c_out, kernel_size, num_res_block):
    K = kernel_size
    T = 2 * num_res_block + 1
    keys = iter(jax.random.split(key, 4 + 5 * T))

    # Head: DWSC(c_in -> c_out); only the DWSC's own BN (conv wrapper has BN=False).
    dw0 = 0.2 * jax.random.normal(next(keys), (K * K, c_in), jnp.float32)
    pw0 = 0.2 * jax.random.normal(next(keys), (c_out, c_in), jnp.float32)
    pb0 = 0.1 * jax.random.normal(next(keys), (c_out,), jnp.float32)
    g, b, m, v = _rand_bn(next(keys), c_out)
    sc0, sh0 = _fold_bn1(pb0, g, b, m, v)

    # Body: 2*num_res_block ResBlock stages + tail conv; each has DWSC.bn + wrapper BN.
    dws, pws, scs, shs = [], [], [], []
    for _ in range(T):
        dw = 0.2 * jax.random.normal(next(keys), (K * K, c_out), jnp.float32)
        pw = 0.2 * jax.random.normal(next(keys), (c_out, c_out), jnp.float32)
        pb = 0.1 * jax.random.normal(next(keys), (c_out,), jnp.float32)
        g1, b1, m1, v1 = _rand_bn(next(keys), c_out)   # DWSC.bn
        g2, b2, m2, v2 = _rand_bn(next(keys), c_out)   # conv wrapper BN
        sc, sh = _fold_bn2(pb, g1, b1, m1, v1, g2, b2, m2, v2)
        dws.append(dw); pws.append(pw); scs.append(sc); shs.append(sh)

    return (dw0, pw0, sc0, sh0,
            jnp.stack(dws), jnp.stack(pws), jnp.stack(scs), jnp.stack(shs))


# -----------------------------------------------------------------------------
# Pure-JAX NCHW reference (same folded math, no Pallas) for verification.
# -----------------------------------------------------------------------------
def _dwsc_stage_ref(x, dw, pw, scale, shift, relu, K):
    N, C, H, W = x.shape
    P = K // 2
    xp = jnp.pad(x, ((0, 0), (0, 0), (P, P), (P, P)))
    acc = jnp.zeros_like(x)
    k = 0
    for dy in range(K):
        for dx in range(K):
            acc = acc + xp[:, :, dy:dy + H, dx:dx + W] * dw[k][None, :, None, None]
            k += 1
    y = jnp.einsum("oc,nchw->nohw", pw, acc, precision=jax.lax.Precision.HIGHEST)
    y = y * scale[None, :, None, None] + shift[None, :, None, None]
    return jnp.maximum(y, 0.0) if relu else y


def basicblock_ref(x, params, kernel_size, num_res_block):
    dw0, pw0, sc0, sh0, dws, pws, scs, shs = params
    K = kernel_size
    head = _dwsc_stage_ref(x, dw0, pw0, sc0, sh0, True, K)
    v = head
    t = 0
    for _ in range(num_res_block):
        rb = v
        v = _dwsc_stage_ref(v, dws[t], pws[t], scs[t], shs[t], True, K); t += 1
        v = _dwsc_stage_ref(v, dws[t], pws[t], scs[t], shs[t], False, K); t += 1
        v = v + rb
    v = _dwsc_stage_ref(v, dws[t], pws[t], scs[t], shs[t], False, K)
    return v + head


if __name__ == "__main__":
    N, C_IN, C_OUT, H, W, K = 2, 4, 8, 16, 16, 3
    NUM_RES_BLOCK = 1

    key = jax.random.PRNGKey(0)
    kx, kp = jax.random.split(key)
    x = jax.random.normal(kx, (N, C_IN, H, W), jnp.float32)   # NCHW, PyTorch convention
    params = make_params(kp, C_IN, C_OUT, K, NUM_RES_BLOCK)

    out = basicblock_pallas(x, params, kernel_size=K, num_res_block=NUM_RES_BLOCK)
    out = jax.block_until_ready(out)

    ref = basicblock_ref(x, params, K, NUM_RES_BLOCK)
    assert out.shape == (N, C_OUT, H, W)
    # f32 compute + Precision.HIGHEST on the pointwise matmuls => tight numerics.
    err = float(jnp.max(jnp.abs(out - ref)))
    assert jnp.allclose(out, ref, rtol=1e-3, atol=1e-3), f"mismatch vs reference: max abs err = {err}"
    print("KERNEL_OK")
</pallas_src>

<mosaic_0001>
module attributes {stable_mosaic.version = 11 : i64} {
  func.func @probe(%arg0: memref<8x128xf32, #tpu.memory_space<vmem>>, %arg1: memref<8x128xf32, #tpu.memory_space<vmem>>) attributes {dimension_semantics = [], scalar_prefetch = 0 : i64, scratch_operands = 0 : i64, tpu.core_type = #tpu.core_type<tc>} {
    %c0 = arith.constant 0 : index
    %c0_0 = arith.constant 0 : index
    %0 = vector.load %arg0[%c0, %c0_0] : memref<8x128xf32, #tpu.memory_space<vmem>>, vector<8x128xf32>
    %c3_i32 = arith.constant 3 : i32
    %1 = tpu.dynamic_rotate %0 by %c3_i32 dim 1 : vector<8x128xf32>, i32 -> vector<8x128xf32>
    %c0_1 = arith.constant 0 : index
    %c0_2 = arith.constant 0 : index
    %2 = vector.load %arg1[%c0_1, %c0_2] : memref<8x128xf32, #tpu.memory_space<vmem>>, vector<8x128xf32>
    tpu.vector_store %arg1[%c0_1, %c0_2], %1 {strides = array<i32>} : memref<8x128xf32, #tpu.memory_space<vmem>>, vector<8x128xf32>,
    return
  }
}

</mosaic_0001>

<llo_original>
// kernel: tpu_custom_call.1
$region0: #{tpu_custom_call.1}
  #allocation0 [shape = 'u32[]', space=smem, size = 0x4, offset = 0x4, fixed_abs, tag = 'smem constant byte address 0x4 - core index']
  #allocation1 [shape = 'u32[144,128]{1,0:T(1,128)}', space=vmem, size = 0x12000, scoped, tag = 'internal scratch']
  %s0 = inlined_call_operand.hbm [shape: f32[8,128], index: 0, kind: input, shape index: {}]
  %s1 = inlined_call_operand.hbm [shape: f32[8,128], index: 1, kind: output, shape index: {}]
  %s2 = sld [smem:[#allocation0]]
  $region18: #{tpu_custom_call.1} parent=0
    _
  %s4 = ssub.s32 1, %s2
  %s5 = scalar_select 0, %s4, %s2
  $region1: #{tpu_custom_call.1} parent=0
    #allocation2 [shape = 'u8[4096]{0}', space=vmem, size = 0x1000, scoped, tag = 'input window, operand 0, single buffered']
    #allocation3 [shape = 's32[1]{0}', space=sflag, size = 0x4, scoped, tag = 'scoped memory for tpu_custom_call.1']
    #allocation4 [shape = 's32[1]{0}', space=sflag, size = 0x4, scoped, tag = 'scoped memory for tpu_custom_call.1']
    #allocation5 [shape = 'u8[4096]{0}', space=vmem, size = 0x1000, scoped, tag = 'output window, operand 0, single buffered']
    %6 = vsyncpa [#allocation3], 0
    %7 = vsyncpa [#allocation4], 0
    // Predicated region
    $region2: #{tpu_custom_call.1} parent=1 // pred_check
      _
    $region3: #{tpu_custom_call.1} parent=1 // pred_check_branch
      %9 = sbr.rel (0) target = $region5
    $region4: #{tpu_custom_call.1} parent=1 // pred_region
      %s11 = ssub.s32 128, 128
      %12 = vsyncadd [#allocation3], %s11
      %s14 = sshll.u32 [#allocation2], 4
      %s15 = int_to_ptr.vmem [resolvable:$true] %s14
      %17 = dma.hbm_to_vmem [thread:$0]  %s0, 128, %s15, [#allocation3]
    $region5: #{tpu_custom_call.1} parent=1 // pred_fallthru
      _
    // Predicated region
    $region6: #{tpu_custom_call.1} parent=1 // pred_check
      _
    $region7: #{tpu_custom_call.1} parent=1 // pred_check_branch
      %19 = sbr.rel (0) target = $region9
    $region8: #{tpu_custom_call.1} parent=1 // pred_region
      %20 = dma.done [#allocation3], 128
    $region9: #{tpu_custom_call.1} parent=1 // pred_fallthru
      _
    %v21 = vld [vmem:[#allocation2] sm:$0xff]
    %22 = vrot.lane.b32.xlu0 %v21, 3
    %v23 = vpop.permute.xlu0 %22
    %24 = vst [vmem:[#allocation5] sm:$0xff] %v23
    // Predicated region
    $region10: #{tpu_custom_call.1} parent=1 // pred_check
      _
    $region11: #{tpu_custom_call.1} parent=1 // pred_check_branch
      %26 = sbr.rel (0) target = $region13
    $region12: #{tpu_custom_call.1} parent=1 // pred_region
      %s28 = ssub.s32 128, 128
      %29 = vsyncadd [#allocation4], %s28
      %s31 = sshll.u32 [#allocation5], 4
      %s32 = int_to_ptr.vmem [resolvable:$true] %s31
      %34 = dma.vmem_to_hbm [thread:$0]  %s32, 128, %s1, [#allocation4]
    $region13: #{tpu_custom_call.1} parent=1 // pred_fallthru
      _
    // Predicated region
    $region14: #{tpu_custom_call.1} parent=1 // pred_check
      _
    $region15: #{tpu_custom_call.1} parent=1 // pred_check_branch
      %36 = sbr.rel (0) target = $region17
    $region16: #{tpu_custom_call.1} parent=1 // pred_region
      %37 = dma.done [#allocation4], 128
    $region17: #{tpu_custom_call.1} parent=1 // pred_fallthru
      _
    %38 = vsyncpa [#allocation3], 1
    %39 = vsyncpa [#allocation4], 1

</llo_original>
